<compile_context>
chip_gen: v6e
topology: v6e:2x2x1
jax: 0.10.0
libtpu: 0.0.40
codegen_flags: <defaults>
</compile_context>

<pallas_src>
import numpy as np
import jax
import jax.numpy as jnp
from jax.experimental import pallas as pl
from jax.experimental.pallas import tpu as pltpu

NCOLS = 55                       # RY + YG + GC + CB + BM + MR
BIG = 10000000.0
EPS = float(np.finfo(np.float64).eps)   # matches np.finfo(float).eps in torch code
LANES = 128
DEFAULT_TILE_ROWS = 2048         # 2048 * 128 px per grid step (~10 MiB dbl-buffered)

# atan(t) for t in [0, 1]: odd degree-9 minimax polynomial (Abramowitz &
# Stegun 4.4.49), |err| <= ~1.1e-5 rad -> <= ~3.5e-5 on the final color.
_A1 = 0.9998660
_A3 = -0.3302995
_A5 = 0.1801410
_A7 = -0.0851330
_A9 = 0.0208351
_PI = float(np.pi)
_HALF_PI = float(np.pi / 2.0)
_ANG2IDX = float((NCOLS - 1) / (2.0 * np.pi))   # 54 / (2*pi)
_IDX_MID = float((NCOLS - 1) / 2.0)             # 27
_TINY = 1e-37                                    # safe-divide floor (normal f32)


def make_colorwheel():
    """NumPy port of makeColorwheel(); returns (55, 3) in [0, 1]. (used by ref)"""
    RY, YG, GC, CB, BM, MR = 15, 6, 4, 11, 13, 6
    ncols = RY + YG + GC + CB + BM + MR
    cw = np.zeros((ncols, 3), np.float32)
    col = 0
    cw[col:col + RY, 0] = 255
    cw[col:col + RY, 1] = np.linspace(0, 255, RY)
    col += RY
    cw[col:col + YG, 0] = np.linspace(255, 0, YG)
    cw[col:col + YG, 1] = 255
    col += YG
    cw[col:col + GC, 1] = 255
    cw[col:col + GC, 2] = np.linspace(0, 255, GC)
    col += GC
    cw[col:col + CB, 1] = np.linspace(255, 0, CB)
    cw[col:col + CB, 2] = 255
    col += CB
    cw[col:col + BM, 2] = 255
    cw[col:col + BM, 0] = np.linspace(0, 255, BM)
    col += BM
    cw[col:col + MR, 2] = np.linspace(255, 0, MR)
    cw[col:col + MR, 0] = 255
    return (cw / 255.0).astype(np.float32)


def _round_up(x, m):
    return ((x + m - 1) // m) * m


def plotflow_kernel(inv_ref, flow_ref, out_ref):
    # inv_ref : (N,) f32, scalar-prefetched into SMEM  -- scale / maxrad per batch
    # flow_ref: (2, R, 128) f32  -- one pixel tile, channel-major
    # out_ref : (3, R, 128)      -- RGB pixel tile (f32 or bf16)
    b = pl.program_id(0)

    u = flow_ref[0]                                           # (R, 128)
    v = flow_ref[1]

    au = jnp.abs(u)
    av = jnp.abs(v)
    known = jnp.logical_and(au <= BIG, av <= BIG)
    knownf = known.astype(jnp.float32)
    # select-based masking (not multiply) so inf/nan inputs can't poison the math
    au = jnp.where(known, au, 0.0)
    av = jnp.where(known, av, 0.0)

    # ---- hand-rolled atan2(-v, -u), folded straight into the colorwheel
    # coordinate x = atan2(-v,-u) * 54/(2*pi) + 27  in [0, 54] ----------------
    mn = jnp.minimum(au, av)
    mx = jnp.maximum(au, av)
    r0 = pl.reciprocal(jnp.maximum(mx, _TINY), approx=True)   # EUP slot
    r0 = r0 * (2.0 - mx * r0)                                 # one Newton step
    t = mn * r0                                               # in [0, 1]
    t2 = t * t
    p = ((((_A9 * t2 + _A7) * t2 + _A5) * t2 + _A3) * t2 + _A1) * t   # atan(t)
    phi = jnp.where(av > au, _HALF_PI - p, p)      # octant swap  (|b| > |a|)
    phi = jnp.where(u > 0.0, _PI - phi, phi)       # a = -u < 0  -> pi - phi
    q = phi * _ANG2IDX
    x = jnp.where(v > 0.0, _IDX_MID - q, _IDX_MID + q)   # sign(b) with b = -v

    # ---- exact piecewise-linear evaluation of the 55-entry colorwheel (equals
    # bilinear grid_sample with align_corners=True / border padding; flat
    # outside [0, 54] so tiny polynomial overshoot cannot extrapolate) --------
    r_c = 1.0 \
        - jnp.clip(x - 15.0, 0.0, 5.0) * (1.0 / 5.0) \
        + jnp.clip(x - 36.0, 0.0, 12.0) * (1.0 / 12.0)
    g_c = jnp.clip(x, 0.0, 14.0) * (1.0 / 14.0) \
        - jnp.clip(x - 25.0, 0.0, 10.0) * (1.0 / 10.0)
    b_c = jnp.clip(x - 21.0, 0.0, 3.0) * (1.0 / 3.0) \
        - jnp.clip(x - 49.0, 0.0, 5.0) * (1.0 / 5.0)

    # ---- folded epilogue: knownf*(1 - rad_n*(1-c)) = aterm + bterm*c --------
    radius = jnp.sqrt(au * au + av * av + EPS)                # (R, 128)
    rad_n = radius * inv_ref[b]                               # per-batch scalar
    bterm = knownf * rad_n
    aterm = knownf - bterm
    out_ref[0] = (aterm + bterm * r_c).astype(out_ref.dtype)
    out_ref[1] = (aterm + bterm * g_c).astype(out_ref.dtype)
    out_ref[2] = (aterm + bterm * b_c).astype(out_ref.dtype)


def _choose_tile_rows(rows_pad, n_batch, requested):
    """Pick R: multiple of 8, <= rows_pad, big by default, >=2 grid steps if N==1."""
    if requested is not None:
        return min(max(8, _round_up(int(requested), 8)), rows_pad)
    target = min(DEFAULT_TILE_ROWS, rows_pad)
    if n_batch == 1 and rows_pad >= 16:
        # keep at least 2 grid steps so both v7x TensorCores get parallel work
        target = min(target, _round_up(-(-rows_pad // 2), 8))
    return target


def plot_flow(flow, scale=1.0, tile_rows=None, out_dtype=jnp.float32):
    """Pallas PlotFlow. Accepts (N,2,H,W) or (N,H,W,2); returns (N,3,H,W)."""
    if flow.shape[-1] == 2:
        # TODO(synk): fuse this NHWC->NCHW transpose into the kernel's loads
        # (interleaved lane de-swizzle) to save one full HBM round trip.
        flow = jnp.transpose(flow, (0, 3, 1, 2))
    N, C, H, W = flow.shape
    assert C == 2
    HW = H * W
    flow = flow.astype(jnp.float32)

    # ---- pass 1 (wrapper-side, single fused reduce): per-batch 1 / maxrad ----
    u0, v0 = flow[:, 0], flow[:, 1]
    known0 = jnp.logical_and(jnp.abs(u0) <= BIG, jnp.abs(v0) <= BIG)
    um = jnp.where(known0, u0, 0.0)
    vm = jnp.where(known0, v0, 0.0)
    maxrad = jnp.sqrt(jnp.max(um * um + vm * vm, axis=(1, 2)) + EPS)   # (N,)
    inv = (scale / maxrad).astype(jnp.float32)                         # (N,)

    # ---- pass 2: tiled Pallas kernel over a sublane-dense (rows, 128) layout.
    # Pad only to the sublane minimum (rows -> multiple of 8); for typical
    # image sizes (HW % 1024 == 0) this makes every reshape a free view.
    rows = -(-HW // LANES)
    rows_pad = _round_up(rows, 8)
    HW_pad = rows_pad * LANES

    flow_flat = flow.reshape(N, 2, HW)
    if HW_pad != HW:
        flow_flat = jnp.pad(flow_flat, ((0, 0), (0, 0), (0, HW_pad - HW)))
    flow_tiles = flow_flat.reshape(N, 2, rows_pad, LANES)

    R = _choose_tile_rows(rows_pad, N, tile_rows)
    num_tiles = -(-rows_pad // R)        # ragged last block handled by Pallas

    out = pl.pallas_call(
        plotflow_kernel,
        out_shape=jax.ShapeDtypeStruct((N, 3, rows_pad, LANES), out_dtype),
        grid_spec=pltpu.PrefetchScalarGridSpec(
            num_scalar_prefetch=1,                       # inv -> SMEM
            grid=(N, num_tiles),
            in_specs=[
                pl.BlockSpec((None, 2, R, LANES), lambda b, t, inv: (b, 0, t, 0)),
            ],
            out_specs=pl.BlockSpec((None, 3, R, LANES), lambda b, t, inv: (b, 0, t, 0)),
        ),
        compiler_params=pltpu.CompilerParams(
            dimension_semantics=("parallel", "parallel")),
    )(inv, flow_tiles)

    out = out.reshape(N, 3, HW_pad)
    if HW_pad != HW:
        out = out[:, :, :HW]
    return out.reshape(N, 3, H, W)


def plot_flow_ref(flow, scale=1.0):
    """Pure-JAX reference (mirrors the PyTorch forward)."""
    if flow.shape[-1] != 2:
        flow = jnp.transpose(flow, (0, 2, 3, 1))              # -> (N, H, W, 2)
    flow = flow.astype(jnp.float32)
    known = jnp.abs(flow) <= BIG
    idx_known = known[..., 0] & known[..., 1]
    flow = flow * idx_known[..., None]
    u, v = flow[..., 0], flow[..., 1]
    angle = jnp.arctan2(-v, -u) / np.pi
    x = jnp.clip((angle + 1.0) * 0.5 * float(NCOLS - 1), 0.0, float(NCOLS - 1))
    x0 = jnp.floor(x).astype(jnp.int32)
    x1 = jnp.minimum(x0 + 1, NCOLS - 1)
    w1 = x - x0.astype(jnp.float32)
    w0 = 1.0 - w1
    cmap = jnp.asarray(1.0 - make_colorwheel().T)             # (3, 55)
    c0 = cmap[:, x0]                                          # (3, N, H, W)
    c1 = cmap[:, x1]
    flowmap = jnp.transpose(c0 * w0[None] + c1 * w1[None], (1, 0, 2, 3))
    radius = jnp.sqrt(u ** 2 + v ** 2 + EPS)
    maxrad = jnp.max(radius.reshape(radius.shape[0], -1), axis=1).reshape(-1, 1, 1)
    flowmap = 1.0 - (radius / (maxrad / scale))[:, None] * flowmap
    return flowmap * idx_known[:, None].astype(flowmap.dtype)


if __name__ == "__main__":
    key = jax.random.PRNGKey(0)
    k1, k2, k3 = jax.random.split(key, 3)

    # Test 1: NCHW input, default tiling, one "unknown" pixel (validity mask).
    N, H, W = 2, 16, 16
    flow = jax.random.normal(k1, (N, 2, H, W), dtype=jnp.float32) * 5.0
    flow = flow.at[0, 0, 0, 0].set(2.0e7)
    out = jax.block_until_ready(plot_flow(flow, scale=1.0))
    ref = jax.block_until_ready(plot_flow_ref(flow, scale=1.0))
    assert out.shape == (N, 3, H, W)
    np.testing.assert_allclose(np.asarray(out), np.asarray(ref),
                               rtol=1e-4, atol=1e-4)

    # Test 2: NHWC input, forced small tile -> multi-step grid + HW padding path.
    flow2 = jax.random.normal(k2, (1, 40, 40, 2), dtype=jnp.float32) * 3.0
    out2 = jax.block_until_ready(plot_flow(flow2, scale=1.0, tile_rows=8))
    ref2 = jax.block_until_ready(plot_flow_ref(flow2, scale=1.0))
    assert out2.shape == (1, 3, 40, 40)
    np.testing.assert_allclose(np.asarray(out2), np.asarray(ref2),
                               rtol=1e-4, atol=1e-4)

    # Test 3: tile that does not divide the padded row count -> ragged last
    # block (Pallas masks the out-of-bounds writes).
    flow3 = jax.random.normal(k3, (1, 2, 56, 56), dtype=jnp.float32) * 4.0
    out3 = jax.block_until_ready(plot_flow(flow3, scale=1.0, tile_rows=24))
    ref3 = jax.block_until_ready(plot_flow_ref(flow3, scale=1.0))
    assert out3.shape == (1, 3, 56, 56)
    np.testing.assert_allclose(np.asarray(out3), np.asarray(ref3),
                               rtol=1e-4, atol=1e-4)

    # Test 4: optional bf16 output path (halves output HBM traffic).
    out4 = jax.block_until_ready(plot_flow(flow, scale=1.0, out_dtype=jnp.bfloat16))
    np.testing.assert_allclose(np.asarray(out4.astype(jnp.float32)),
                               np.asarray(ref), rtol=2e-2, atol=2e-2)

    print("KERNEL_OK")
</pallas_src>

<mosaic_0001>
module attributes {stable_mosaic.version = 11 : i64} {
  func.func @plotflow_kernel(%arg0: i32, %arg1: i32, %arg2: memref<2xf32, #tpu.memory_space<smem>>, %arg3: memref<1x2x8x128xf32, #tpu.memory_space<vmem>>, %arg4: memref<1x3x8x128xf32, #tpu.memory_space<vmem>>) attributes {dimension_semantics = [#tpu.dimension_semantics<parallel>, #tpu.dimension_semantics<parallel>], iteration_bounds = array<i64: 2, 1>, scalar_prefetch = 1 : i64, scratch_operands = 0 : i64, tpu.core_type = #tpu.core_type<tc>, window_params = [{transform_indices = @transform_0, window_bounds = array<i64: 1, 2, 8, 128>}, {transform_indices = @transform_1, window_bounds = array<i64: 1, 3, 8, 128>}]} {
    %c0 = arith.constant 0 : index
    %c0_0 = arith.constant 0 : index
    %c0_1 = arith.constant 0 : index
    %c0_2 = arith.constant 0 : index
    %0 = vector.load %arg3[%c0, %c0_0, %c0_1, %c0_2] : memref<1x2x8x128xf32, #tpu.memory_space<vmem>>, vector<1x1x8x128xf32>
    %1 = vector.shape_cast %0 : vector<1x1x8x128xf32> to vector<8x128xf32>
    %c0_3 = arith.constant 0 : index
    %c1 = arith.constant 1 : index
    %c0_4 = arith.constant 0 : index
    %c0_5 = arith.constant 0 : index
    %2 = vector.load %arg3[%c0_3, %c1, %c0_4, %c0_5] : memref<1x2x8x128xf32, #tpu.memory_space<vmem>>, vector<1x1x8x128xf32>
    %3 = vector.shape_cast %2 : vector<1x1x8x128xf32> to vector<8x128xf32>
    %4 = math.absf %1 : vector<8x128xf32>
    %5 = math.absf %3 : vector<8x128xf32>
    %cst = arith.constant 1.000000e+07 : f32
    %6 = vector.broadcast %cst : f32 to vector<8x128xf32>
    %7 = arith.cmpf ole, %4, %6 : vector<8x128xf32>
    %cst_6 = arith.constant 1.000000e+07 : f32
    %8 = vector.broadcast %cst_6 : f32 to vector<8x128xf32>
    %9 = arith.cmpf ole, %5, %8 : vector<8x128xf32>
    %10 = arith.andi %7, %9 : vector<8x128xi1>
    %11 = arith.extui %10 : vector<8x128xi1> to vector<8x128xi32>
    %12 = arith.sitofp %11 : vector<8x128xi32> to vector<8x128xf32>
    %cst_7 = arith.constant 0.000000e+00 : f32
    %13 = vector.broadcast %cst_7 : f32 to vector<8x128xf32>
    %14 = arith.select %10, %4, %13 : vector<8x128xi1>, vector<8x128xf32>
    %cst_8 = arith.constant 0.000000e+00 : f32
    %15 = vector.broadcast %cst_8 : f32 to vector<8x128xf32>
    %16 = arith.select %10, %5, %15 : vector<8x128xi1>, vector<8x128xf32>
    %17 = arith.minimumf %14, %16 : vector<8x128xf32>
    %18 = arith.maximumf %14, %16 : vector<8x128xf32>
    %cst_9 = arith.constant 9.99999991E-38 : f32
    %19 = vector.broadcast %cst_9 : f32 to vector<8x128xf32>
    %20 = arith.maximumf %18, %19 : vector<8x128xf32>
    %21 = tpu.reciprocal %20 {approx = true} : vector<8x128xf32> -> vector<8x128xf32>
    %22 = arith.mulf %18, %21 : vector<8x128xf32>
    %cst_10 = arith.constant 2.000000e+00 : f32
    %23 = vector.broadcast %cst_10 : f32 to vector<8x128xf32>
    %24 = arith.subf %23, %22 : vector<8x128xf32>
    %25 = arith.mulf %21, %24 : vector<8x128xf32>
    %26 = arith.mulf %17, %25 : vector<8x128xf32>
    %27 = arith.mulf %26, %26 : vector<8x128xf32>
    %cst_11 = arith.constant 2.083510e-02 : f32
    %28 = vector.broadcast %cst_11 : f32 to vector<8x128xf32>
    %29 = arith.mulf %28, %27 : vector<8x128xf32>
    %cst_12 = arith.constant -8.513300e-02 : f32
    %30 = vector.broadcast %cst_12 : f32 to vector<8x128xf32>
    %31 = arith.addf %29, %30 : vector<8x128xf32>
    %32 = arith.mulf %31, %27 : vector<8x128xf32>
    %cst_13 = arith.constant 1.801410e-01 : f32
    %33 = vector.broadcast %cst_13 : f32 to vector<8x128xf32>
    %34 = arith.addf %32, %33 : vector<8x128xf32>
    %35 = arith.mulf %34, %27 : vector<8x128xf32>
    %cst_14 = arith.constant -0.330299497 : f32
    %36 = vector.broadcast %cst_14 : f32 to vector<8x128xf32>
    %37 = arith.addf %35, %36 : vector<8x128xf32>
    %38 = arith.mulf %37, %27 : vector<8x128xf32>
    %cst_15 = arith.constant 9.998660e-01 : f32
    %39 = vector.broadcast %cst_15 : f32 to vector<8x128xf32>
    %40 = arith.addf %38, %39 : vector<8x128xf32>
    %41 = arith.mulf %40, %26 : vector<8x128xf32>
    %42 = arith.cmpf ogt, %16, %14 : vector<8x128xf32>
    %cst_16 = arith.constant 1.57079637 : f32
    %43 = vector.broadcast %cst_16 : f32 to vector<8x128xf32>
    %44 = arith.subf %43, %41 : vector<8x128xf32>
    %45 = arith.select %42, %44, %41 : vector<8x128xi1>, vector<8x128xf32>
    %cst_17 = arith.constant 0.000000e+00 : f32
    %46 = vector.broadcast %cst_17 : f32 to vector<8x128xf32>
    %47 = arith.cmpf ogt, %1, %46 : vector<8x128xf32>
    %cst_18 = arith.constant 3.14159274 : f32
    %48 = vector.broadcast %cst_18 : f32 to vector<8x128xf32>
    %49 = arith.subf %48, %45 : vector<8x128xf32>
    %50 = arith.select %47, %49, %45 : vector<8x128xi1>, vector<8x128xf32>
    %cst_19 = arith.constant 8.59436702 : f32
    %51 = vector.broadcast %cst_19 : f32 to vector<8x128xf32>
    %52 = arith.mulf %50, %51 : vector<8x128xf32>
    %cst_20 = arith.constant 0.000000e+00 : f32
    %53 = vector.broadcast %cst_20 : f32 to vector<8x128xf32>
    %54 = arith.cmpf ogt, %3, %53 : vector<8x128xf32>
    %cst_21 = arith.constant 2.700000e+01 : f32
    %55 = vector.broadcast %cst_21 : f32 to vector<8x128xf32>
    %56 = arith.subf %55, %52 : vector<8x128xf32>
    %cst_22 = arith.constant 2.700000e+01 : f32
    %57 = vector.broadcast %cst_22 : f32 to vector<8x128xf32>
    %58 = arith.addf %57, %52 : vector<8x128xf32>
    %59 = arith.select %54, %56, %58 : vector<8x128xi1>, vector<8x128xf32>
    %cst_23 = arith.constant 1.500000e+01 : f32
    %60 = vector.broadcast %cst_23 : f32 to vector<8x128xf32>
    %61 = arith.subf %59, %60 : vector<8x128xf32>
    %cst_24 = arith.constant 0.000000e+00 : f32
    %cst_25 = arith.constant 5.000000e+00 : f32
    %62 = vector.broadcast %cst_24 : f32 to vector<8x128xf32>
    %63 = arith.maximumf %62, %61 : vector<8x128xf32>
    %64 = vector.broadcast %cst_25 : f32 to vector<8x128xf32>
    %65 = arith.minimumf %64, %63 : vector<8x128xf32>
    %cst_26 = arith.constant 2.000000e-01 : f32
    %66 = vector.broadcast %cst_26 : f32 to vector<8x128xf32>
    %67 = arith.mulf %65, %66 : vector<8x128xf32>
    %cst_27 = arith.constant 1.000000e+00 : f32
    %68 = vector.broadcast %cst_27 : f32 to vector<8x128xf32>
    %69 = arith.subf %68, %67 : vector<8x128xf32>
    %cst_28 = arith.constant 3.600000e+01 : f32
    %70 = vector.broadcast %cst_28 : f32 to vector<8x128xf32>
    %71 = arith.subf %59, %70 : vector<8x128xf32>
    %cst_29 = arith.constant 0.000000e+00 : f32
    %cst_30 = arith.constant 1.200000e+01 : f32
    %72 = vector.broadcast %cst_29 : f32 to vector<8x128xf32>
    %73 = arith.maximumf %72, %71 : vector<8x128xf32>
    %74 = vector.broadcast %cst_30 : f32 to vector<8x128xf32>
    %75 = arith.minimumf %74, %73 : vector<8x128xf32>
    %cst_31 = arith.constant 0.0833333358 : f32
    %76 = vector.broadcast %cst_31 : f32 to vector<8x128xf32>
    %77 = arith.mulf %75, %76 : vector<8x128xf32>
    %78 = arith.addf %69, %77 : vector<8x128xf32>
    %cst_32 = arith.constant 0.000000e+00 : f32
    %cst_33 = arith.constant 1.400000e+01 : f32
    %79 = vector.broadcast %cst_32 : f32 to vector<8x128xf32>
    %80 = arith.maximumf %79, %59 : vector<8x128xf32>
    %81 = vector.broadcast %cst_33 : f32 to vector<8x128xf32>
    %82 = arith.minimumf %81, %80 : vector<8x128xf32>
    %cst_34 = arith.constant 0.0714285746 : f32
    %83 = vector.broadcast %cst_34 : f32 to vector<8x128xf32>
    %84 = arith.mulf %82, %83 : vector<8x128xf32>
    %cst_35 = arith.constant 2.500000e+01 : f32
    %85 = vector.broadcast %cst_35 : f32 to vector<8x128xf32>
    %86 = arith.subf %59, %85 : vector<8x128xf32>
    %cst_36 = arith.constant 0.000000e+00 : f32
    %cst_37 = arith.constant 1.000000e+01 : f32
    %87 = vector.broadcast %cst_36 : f32 to vector<8x128xf32>
    %88 = arith.maximumf %87, %86 : vector<8x128xf32>
    %89 = vector.broadcast %cst_37 : f32 to vector<8x128xf32>
    %90 = arith.minimumf %89, %88 : vector<8x128xf32>
    %cst_38 = arith.constant 1.000000e-01 : f32
    %91 = vector.broadcast %cst_38 : f32 to vector<8x128xf32>
    %92 = arith.mulf %90, %91 : vector<8x128xf32>
    %93 = arith.subf %84, %92 : vector<8x128xf32>
    %cst_39 = arith.constant 2.100000e+01 : f32
    %94 = vector.broadcast %cst_39 : f32 to vector<8x128xf32>
    %95 = arith.subf %59, %94 : vector<8x128xf32>
    %cst_40 = arith.constant 0.000000e+00 : f32
    %cst_41 = arith.constant 3.000000e+00 : f32
    %96 = vector.broadcast %cst_40 : f32 to vector<8x128xf32>
    %97 = arith.maximumf %96, %95 : vector<8x128xf32>
    %98 = vector.broadcast %cst_41 : f32 to vector<8x128xf32>
    %99 = arith.minimumf %98, %97 : vector<8x128xf32>
    %cst_42 = arith.constant 0.333333343 : f32
    %100 = vector.broadcast %cst_42 : f32 to vector<8x128xf32>
    %101 = arith.mulf %99, %100 : vector<8x128xf32>
    %cst_43 = arith.constant 4.900000e+01 : f32
    %102 = vector.broadcast %cst_43 : f32 to vector<8x128xf32>
    %103 = arith.subf %59, %102 : vector<8x128xf32>
    %cst_44 = arith.constant 0.000000e+00 : f32
    %cst_45 = arith.constant 5.000000e+00 : f32
    %104 = vector.broadcast %cst_44 : f32 to vector<8x128xf32>
    %105 = arith.maximumf %104, %103 : vector<8x128xf32>
    %106 = vector.broadcast %cst_45 : f32 to vector<8x128xf32>
    %107 = arith.minimumf %106, %105 : vector<8x128xf32>
    %cst_46 = arith.constant 2.000000e-01 : f32
    %108 = vector.broadcast %cst_46 : f32 to vector<8x128xf32>
    %109 = arith.mulf %107, %108 : vector<8x128xf32>
    %110 = arith.subf %101, %109 : vector<8x128xf32>
    %111 = arith.mulf %14, %14 : vector<8x128xf32>
    %112 = arith.mulf %16, %16 : vector<8x128xf32>
    %113 = arith.addf %111, %112 : vector<8x128xf32>
    %cst_47 = arith.constant 2.22044605E-16 : f32
    %114 = vector.broadcast %cst_47 : f32 to vector<8x128xf32>
    %115 = arith.addf %113, %114 : vector<8x128xf32>
    %116 = math.sqrt %115 : vector<8x128xf32>
    %117 = arith.index_cast %arg0 : i32 to index
    %118 = memref.load %arg2[%117] : memref<2xf32, #tpu.memory_space<smem>>
    %119 = vector.broadcast %118 : f32 to vector<8x128xf32>
    %120 = arith.mulf %116, %119 : vector<8x128xf32>
    %121 = arith.mulf %12, %120 : vector<8x128xf32>
    %122 = arith.subf %12, %121 : vector<8x128xf32>
    %123 = arith.mulf %121, %78 : vector<8x128xf32>
    %124 = arith.addf %122, %123 : vector<8x128xf32>
    %c0_48 = arith.constant 0 : index
    %c0_49 = arith.constant 0 : index
    %c0_50 = arith.constant 0 : index
    %c0_51 = arith.constant 0 : index
    %125 = vector.load %arg4[%c0_48, %c0_49, %c0_50, %c0_51] : memref<1x3x8x128xf32, #tpu.memory_space<vmem>>, vector<1x1x8x128xf32>
    %126 = vector.shape_cast %125 : vector<1x1x8x128xf32> to vector<8x128xf32>
    %127 = vector.shape_cast %124 : vector<8x128xf32> to vector<1x1x8x128xf32>
    tpu.vector_store %arg4[%c0_48, %c0_49, %c0_50, %c0_51], %127 {strides = array<i32>} : memref<1x3x8x128xf32, #tpu.memory_space<vmem>>, vector<1x1x8x128xf32>,
    %128 = arith.mulf %121, %93 : vector<8x128xf32>
    %129 = arith.addf %122, %128 : vector<8x128xf32>
    %c0_52 = arith.constant 0 : index
    %c1_53 = arith.constant 1 : index
    %c0_54 = arith.constant 0 : index
    %c0_55 = arith.constant 0 : index
    %130 = vector.load %arg4[%c0_52, %c1_53, %c0_54, %c0_55] : memref<1x3x8x128xf32, #tpu.memory_space<vmem>>, vector<1x1x8x128xf32>
    %131 = vector.shape_cast %130 : vector<1x1x8x128xf32> to vector<8x128xf32>
    %132 = vector.shape_cast %129 : vector<8x128xf32> to vector<1x1x8x128xf32>
    tpu.vector_store %arg4[%c0_52, %c1_53, %c0_54, %c0_55], %132 {strides = array<i32>} : memref<1x3x8x128xf32, #tpu.memory_space<vmem>>, vector<1x1x8x128xf32>,
    %133 = arith.mulf %121, %110 : vector<8x128xf32>
    %134 = arith.addf %122, %133 : vector<8x128xf32>
    %c0_56 = arith.constant 0 : index
    %c2 = arith.constant 2 : index
    %c0_57 = arith.constant 0 : index
    %c0_58 = arith.constant 0 : index
    %135 = vector.load %arg4[%c0_56, %c2, %c0_57, %c0_58] : memref<1x3x8x128xf32, #tpu.memory_space<vmem>>, vector<1x1x8x128xf32>
    %136 = vector.shape_cast %135 : vector<1x1x8x128xf32> to vector<8x128xf32>
    %137 = vector.shape_cast %134 : vector<8x128xf32> to vector<1x1x8x128xf32>
    tpu.vector_store %arg4[%c0_56, %c2, %c0_57, %c0_58], %137 {strides = array<i32>} : memref<1x3x8x128xf32, #tpu.memory_space<vmem>>, vector<1x1x8x128xf32>,
    return
  }
  func.func @transform_0(%arg0: i32, %arg1: i32, %arg2: memref<2xf32, #tpu.memory_space<smem>>) -> (i32, i32, i32, i32) {
    %c0_i32 = arith.constant 0 : i32
    %c0_i32_0 = arith.constant 0 : i32
    %c0_i32_1 = arith.constant 0 : i32
    return %arg0, %c0_i32, %arg1, %c0_i32_0 : i32, i32, i32, i32
  }
  func.func @transform_1(%arg0: i32, %arg1: i32, %arg2: memref<2xf32, #tpu.memory_space<smem>>) -> (i32, i32, i32, i32) {
    %c0_i32 = arith.constant 0 : i32
    %c0_i32_0 = arith.constant 0 : i32
    %c0_i32_1 = arith.constant 0 : i32
    return %arg0, %c0_i32, %arg1, %c0_i32_0 : i32, i32, i32, i32
  }
}

</mosaic_0001>

<llo_original>
// kernel: tpu_custom_call.1
$region0: #{tpu_custom_call.1}
  #allocation0 [shape = 'u32[]', space=smem, size = 0x4, offset = 0x4, fixed_abs, tag = 'smem constant byte address 0x4 - core index']
  #allocation1 [shape = 'u32[144,128]{1,0:T(1,128)}', space=vmem, size = 0x12000, scoped, tag = 'internal scratch']
  #allocation2 [shape = 's32[1]{0}', space=sflag, size = 0x4, scoped, tag = 'scoped memory for tpu_custom_call.1']
  #allocation3 [shape = 'u8[512]{0}', space=smem, size = 0x200, scoped, tag = 'prefetched SMEM operand 0']
  %s0 = inlined_call_operand.hbm [shape: f32[2], index: 0, kind: input, shape index: {}]
  %s1 = inlined_call_operand.hbm [shape: f32[2,2,8,128], index: 1, kind: input, shape index: {}]
  %s2 = inlined_call_operand.hbm [shape: f32[2,3,8,128], index: 2, kind: output, shape index: {}]
  %s3 = sld [smem:[#allocation0]]
  $region41: #{tpu_custom_call.1} parent=0
    _
  %s5 = ssub.s32 1, %s3
  %s6 = scalar_select 0, %s5, %s3
  %8 = dma.hbm_to_smem %s0, 16, [#allocation3], [#allocation2]
  %9 = dma.done [#allocation2], 16
  %10 = sfence
  $region1: #{tpu_custom_call.1} parent=0
    #allocation4 [shape = 'u8[16384]{0}', space=vmem, size = 0x4000, scoped, tag = 'input window, operand 1']
    #allocation5 [shape = 's32[2]{0}', space=sflag, size = 0x8, scoped, tag = 'scoped memory for tpu_custom_call.1']
    #allocation6 [shape = 's32[2]{0}', space=sflag, size = 0x8, scoped, tag = 'scoped memory for tpu_custom_call.1']
    #allocation7 [shape = 'u8[24576]{0}', space=vmem, size = 0x6000, scoped, tag = 'output window, operand 0']
    %11 = vsyncpa [#allocation5], 0
    %s12 = scalar_lea.sflag [#allocation5], 1
    %13 = vsyncpa %s12, 0
    %14 = vsyncpa [#allocation6], 0
    %s15 = scalar_lea.sflag [#allocation6], 1
    %16 = vsyncpa %s15, 0
    loop: start=0, step=1, limit=4
    $region2: #{tpu_custom_call.1} parent=1 // loop_pre_header
      _
    $region3: #{tpu_custom_call.1} parent=1 // loop_header
      %s18 = sphi 0, %s22
      %p19 = scmp.ge.s32.totalorder %s18, 4
      %s25 = sphi 0, %s37
      %s26 = sphi 0, %s33
      %s27 = sphi 0, %s25
      %s28 = sphi 0, %s26
      %s29 = sphi 0, %s27
      %s30 = sphi 0, %s28
      %s42 = sphi 0, %s44
      %s45 = sphi 0, %s42
      %s46 = sphi 0, %s45
      %s62 = sphi 0, %s46
      %s70 = sphi 0, %s72
      %s73 = sphi 0, %s70
      %s74 = sphi 0, %s73
      %s90 = sphi 0, %s74
    $region4: #{tpu_custom_call.1} parent=1 // loop_header_branch
      %21 = sbr.rel (%p19) target = $region8
    $region5: #{tpu_custom_call.1} parent=1 // loop_body
      %s23 = ssub.s32 %s18, 1
      %s24 = ssub.s32 %s18, 2
      %s31 = sadd.s32 1, %s26
      %p32 = scmp.ge.s32.totalorder %s31, 1
      %s33 = scalar_select %p32, 0, %s31
      %s34 = sadd.s32 1, %s25
      %s35 = scalar_select %p32, %s34, %s25
      %p36 = scmp.ge.s32.totalorder %s35, 2
      %s37 = scalar_select %p36, 0, %s35
      %s38 = ssub.s32 %s25, %s37
      %s39 = ssub.s32 %s26, %s33
      %s40 = sor.u32 %s38, %s39
      %p41 = scmp.eq.s32.totalorder %s40, 0
      %s43 = sadd.s32 %s42, 1
      %s44 = scalar_select %p41, %s42, %s43
      %p47 = pneg %p41
      %p48 = scmp.eq.s32.totalorder %s18, 1
      %p49 = por %p47, %p48
      %p50 = scmp.ne.s32.totalorder %s42, %s45
      %p51 = scmp.eq.s32.totalorder %s18, 0
      %p52 = por %p50, %p51
      %p53 = scmp.ne.s32.totalorder %s42, %s45
      %p54 = scmp.eq.s32.totalorder %s23, 1
      %p55 = por %p53, %p54
      %p56 = scmp.ne.s32.totalorder %s45, %s46
      %p57 = scmp.eq.s32.totalorder %s23, 0
      %p58 = por %p56, %p57
      %p59 = scmp.ne.s32.totalorder %s45, %s46
      %p60 = scmp.eq.s32.totalorder %s24, 1
      %p61 = por %p59, %p60
      %p63 = scmp.ne.s32.totalorder %s46, %s62
      %p64 = scmp.eq.s32.totalorder %s24, 0
      %p65 = por %p63, %p64
      %s66 = ssub.s32 %s25, %s37
      %s67 = ssub.s32 %s26, %s33
      %s68 = sor.u32 %s66, %s67
      %p69 = scmp.eq.s32.totalorder %s68, 0
      %s71 = sadd.s32 %s70, 1
      %s72 = scalar_select %p69, %s70, %s71
      %p75 = pneg %p69
      %p76 = scmp.eq.s32.totalorder %s18, 1
      %p77 = por %p75, %p76
      %p78 = scmp.ne.s32.totalorder %s70, %s73
      %p79 = scmp.eq.s32.totalorder %s18, 0
      %p80 = por %p78, %p79
      %p81 = scmp.ne.s32.totalorder %s70, %s73
      %p82 = scmp.eq.s32.totalorder %s23, 1
      %p83 = por %p81, %p82
      %p84 = scmp.ne.s32.totalorder %s73, %s74
      %p85 = scmp.eq.s32.totalorder %s23, 0
      %p86 = por %p84, %p85
      %p87 = scmp.ne.s32.totalorder %s73, %s74
      %p88 = scmp.eq.s32.totalorder %s24, 1
      %p89 = por %p87, %p88
      %p91 = scmp.ne.s32.totalorder %s74, %s90
      %p92 = scmp.eq.s32.totalorder %s24, 0
      %p93 = por %p91, %p92
      %p94 = scmp.le.s32.totalorder 1, %s18
      %p95 = scmp.lt.s32.totalorder %s18, 3
      %p96 = pnand %p94, %p95
      %p97 = pneg %p96
      // Predicated region
      $region9: #{tpu_custom_call.1} parent=5 // pred_check
        _
      $region10: #{tpu_custom_call.1} parent=5 // pred_check_branch
        %99 = sbr.rel (%p96) target = $region12
      $region11: #{tpu_custom_call.1} parent=5 // pred_region
        %s100 = ssub.s32 %s18, 1
      $region12: #{tpu_custom_call.1} parent=5 // pred_fallthru
        _
      %p101 = scmp.lt.s32.totalorder %s18, 2
      // Predicated region
      $region13: #{tpu_custom_call.1} parent=5 // pred_check
        %p102 = pneg %p101
      $region14: #{tpu_custom_call.1} parent=5 // pred_check_branch
        %104 = sbr.rel (%p102) target = $region16
      $region15: #{tpu_custom_call.1} parent=5 // pred_region
        // Predicated region
        $region17: #{tpu_custom_call.1} parent=15 // pred_check
          %p105 = pneg %p52
        $region18: #{tpu_custom_call.1} parent=15 // pred_check_branch
          %107 = sbr.rel (%p105) target = $region20
        $region19: #{tpu_custom_call.1} parent=15 // pred_region
          %s108 = sand.u32 %s42, 1
          %s109 = scalar_lea.sflag [#allocation5], %s108
          %s110 = sand.u32 %s42, 1
          %s111 = smul.addr %s110, 16
          %s112 = scalar_lea.vmem [#allocation4], %s111
          %s114 = ssub.s32 256, 256
          %115 = vsyncadd %s109, %s114
          %s116 = smul.addr %s25, 2
          %s117 = sadd.s32 %s26, %s116
          %s118 = smul.addr %s117, 128
          %s119 = scalar_lea.hbm %s1, %s118
          %s120 = sshll.u32 %s112, 4
          %s121 = int_to_ptr.vmem [resolvable:$true] %s120
          %126 = dma.hbm_to_vmem [thread:$0]  %s119, 256, %s121, %s109, 128, 128, 8
        $region20: #{tpu_custom_call.1} parent=15 // pred_fallthru
          _
      $region16: #{tpu_custom_call.1} parent=5 // pred_fallthru
        _
      %p127 = scmp.le.s32.totalorder 1, %s18
      %p128 = scmp.lt.s32.totalorder %s18, 3
      %p129 = pnand %p127, %p128
      %p130 = pneg %p129
      // Predicated region
      $region21: #{tpu_custom_call.1} parent=5 // pred_check
        _
      $region22: #{tpu_custom_call.1} parent=5 // pred_check_branch
        %132 = sbr.rel (%p129) target = $region24
      $region23: #{tpu_custom_call.1} parent=5 // pred_region
        %s133 = ssub.s32 %s18, 1
        %s134 = sand.u32 %s45, 1
        %s135 = scalar_lea.sflag [#allocation5], %s134
        %s136 = sand.u32 %s45, 1
        %s137 = smul.addr %s136, 16
        %s138 = scalar_lea.vmem [#allocation4], %s137
        // Predicated region
        $region25: #{tpu_custom_call.1} parent=23 // pred_check
          %p139 = pneg %p58
        $region26: #{tpu_custom_call.1} parent=23 // pred_check_branch
          %141 = sbr.rel (%p139) target = $region28
        $region27: #{tpu_custom_call.1} parent=23 // pred_region
          %142 = dma.done %s135, 256
        $region28: #{tpu_custom_call.1} parent=23 // pred_fallthru
          _
        %s143 = sand.u32 %s45, 1
        %s144 = scalar_lea.sflag [#allocation5], %s143
        %s145 = sand.u32 %s45, 1
        %s146 = smul.addr %s145, 16
        %s147 = scalar_lea.vmem [#allocation4], %s146
        %p148 = pneg %p58
        %p149 = pneg %p55
        %p150 = pneg %p86
        %p151 = pneg %p83
        %s152 = sand.u32 %s73, 1
        %s153 = scalar_lea.sflag [#allocation6], %s152
        %s154 = sand.u32 %s73, 1
        %s155 = smul.addr %s154, 24
        %s156 = scalar_lea.vmem [#allocation7], %s155
        %v157 = vld [vmem:[%s138] sm:$0xff]
        %s158 = scalar_lea.vmem %s138, 8 [#allocation4]
        %v159 = vld [vmem:[%s158] sm:$0xff]
        %v160 = vand.u32 2147483647, %v157
        %v161 = vand.u32 2147483647, %v159
        %vm162 = vcmp.le.f32.partialorder %v160, 10000000.0
        %vm163 = vcmp.le.f32.partialorder %v161, 10000000.0
        %vm164 = vmand %vm162, %vm163
        %v165 = vsel %vm164, 1, 0
        %v166 = vcvt.s32.f32 %v165
        %v167 = vsel %vm164, %v160, 0.0
        %v168 = vsel %vm164, %v161, 0.0
        %v169 = vmin.f32 %v167, %v168
        %v170 = vmax.f32 %v167, %v168
        %v171 = vmax.f32 %v170, 1e-37
        %v172 = vrcp.pop %v171
        %v173 = vmul.f32 %v170, %v172
        %v174 = vsub.f32 2.0, %v173
        %v175 = vmul.f32 %v172, %v174
        %v176 = vmul.f32 %v169, %v175
        %v177 = vmul.f32 %v176, %v176
        %v178 = vmul.f32 %v177, 0.0208351
        %v179 = vadd.f32 %v178, -0.085133
        %v180 = vmul.f32 %v179, %v177
        %v181 = vadd.f32 %v180, 0.180141
        %v182 = vmul.f32 %v181, %v177
        %v183 = vadd.f32 %v182, -0.3302995
        %v184 = vmul.f32 %v183, %v177
        %v185 = vadd.f32 %v184, 0.999866
        %v186 = vmul.f32 %v185, %v176
        %vm187 = vcmp.gt.f32.partialorder %v168, %v167
        %v188 = vsub.f32 1.5707964, %v186
        %v189 = vsel %vm187, %v188, %v186
        %vm190 = vcmp.gt.f32.partialorder %v157, 0.0
        %v191 = vsub.f32 3.1415927, %v189
        %v192 = vsel %vm190, %v191, %v189
        %v193 = vmul.f32 %v192, 8.594367
        %vm194 = vcmp.gt.f32.partialorder %v159, 0.0
        %v195 = vsub.f32 27.0, %v193
        %v196 = vadd.f32 %v193, 27.0
        %v197 = vsel %vm194, %v195, %v196
        %v198 = vsub.f32 %v197, 15.0
        %v199 = vmax.f32 %v198, 0.0
        %v200 = vmin.f32 %v199, 5.0
        %v201 = vmul.f32 %v200, 0.2
        %v202 = vsub.f32 1.0, %v201
        %v203 = vsub.f32 %v197, 36.0
        %v204 = vmax.f32 %v203, 0.0
        %v205 = vmin.f32 %v204, 12.0
        %v206 = vmul.f32 %v205, 0.083333336
        %v207 = vadd.f32 %v202, %v206
        %v208 = vmax.f32 %v197, 0.0
        %v209 = vmin.f32 %v208, 14.0
        %v210 = vmul.f32 %v209, 0.071428575
        %v211 = vsub.f32 %v197, 25.0
        %v212 = vmax.f32 %v211, 0.0
        %v213 = vmin.f32 %v212, 10.0
        %v214 = vmul.f32 %v213, 0.1
        %v215 = vsub.f32 %v210, %v214
        %v216 = vsub.f32 %v197, 21.0
        %v217 = vmax.f32 %v216, 0.0
        %v218 = vmin.f32 %v217, 3.0
        %v219 = vmul.f32 %v218, 0.33333334
        %v220 = vsub.f32 %v197, 49.0
        %v221 = vmax.f32 %v220, 0.0
        %v222 = vmin.f32 %v221, 5.0
        %v223 = vmul.f32 %v222, 0.2
        %v224 = vsub.f32 %v219, %v223
        %v225 = vmul.f32 %v167, %v167
        %v226 = vmul.f32 %v168, %v168
        %v227 = vadd.f32 %v225, %v226
        %v228 = vadd.f32 %v227, 2.220446e-16
        %v229 = vrsqrt.pop %v228
        %v230 = vmul.f32 %v228, %v229
        %vm231 = vcmp.eq.f32.partialorder %v228, inf
        %v232 = vsel %vm231, %v228, %v230
        %vm233 = vcmp.eq.f32.partialorder %v228, 0.0
        %v234 = vand.u32 %v228, 2147483648
        %v235 = vsel %vm233, %v234, %v232
        %s236 = sld [smem:[#allocation3 + %s27]]
        %v237 = vstv %s236
        %v238 = vmul.f32 %v235, %v237
        %v239 = vmul.f32 %v166, %v238
        %v240 = vsub.f32 %v166, %v239
        %v241 = vmul.f32 %v239, %v207
        %v242 = vadd.f32 %v240, %v241
        %243 = vst [vmem:[%s156] sm:$0xff] %v242
        %v244 = vmul.f32 %v239, %v215
        %v245 = vadd.f32 %v240, %v244
        %s246 = scalar_lea.vmem %s156, 8 [#allocation7]
        %247 = vst [vmem:[%s246] sm:$0xff] %v245
        %v248 = vmul.f32 %v239, %v224
        %v249 = vadd.f32 %v240, %v248
        %s250 = scalar_lea.vmem %s156, 16 [#allocation7]
        %251 = vst [vmem:[%s250] sm:$0xff] %v249
        %s252 = sand.u32 %s73, 1
        %s253 = scalar_lea.sflag [#allocation6], %s252
        %s254 = sand.u32 %s73, 1
        %s255 = smul.addr %s254, 24
        %s256 = scalar_lea.vmem [#allocation7], %s255
        // Predicated region
        $region29: #{tpu_custom_call.1} parent=23 // pred_check
          %p257 = pneg %p83
        $region30: #{tpu_custom_call.1} parent=23 // pred_check_branch
          %259 = sbr.rel (%p257) target = $region32
        $region31: #{tpu_custom_call.1} parent=23 // pred_region
          %s261 = ssub.s32 384, 384
          %262 = vsyncadd %s253, %s261
          %s263 = smul.addr %s27, 3
          %s264 = sadd.s32 %s28, %s263
          %s265 = smul.addr %s264, 128
          %s266 = scalar_lea.hbm %s2, %s265
          %s267 = sshll.u32 %s256, 4
          %s268 = int_to_ptr.vmem [resolvable:$true] %s267
          %273 = dma.vmem_to_hbm [thread:$0]  %s268, 384, %s266, %s253, 128, 128, 8
        $region32: #{tpu_custom_call.1} parent=23 // pred_fallthru
          _
      $region24: #{tpu_custom_call.1} parent=5 // pred_fallthru
        _
      %p274 = scmp.le.s32.totalorder 2, %s18
      // Predicated region
      $region33: #{tpu_custom_call.1} parent=5 // pred_check
        %p275 = pneg %p274
      $region34: #{tpu_custom_call.1} parent=5 // pred_check_branch
        %277 = sbr.rel (%p275) target = $region36
      $region35: #{tpu_custom_call.1} parent=5 // pred_region
        %s278 = ssub.s32 %s18, 2
        // Predicated region
        $region37: #{tpu_custom_call.1} parent=35 // pred_check
          %p279 = pneg %p89
        $region38: #{tpu_custom_call.1} parent=35 // pred_check_branch
          %281 = sbr.rel (%p279) target = $region40
        $region39: #{tpu_custom_call.1} parent=35 // pred_region
          %s282 = sand.u32 %s74, 1
          %s283 = scalar_lea.sflag [#allocation6], %s282
          %s284 = sand.u32 %s74, 1
          %s285 = smul.addr %s284, 24
          %s286 = scalar_lea.vmem [#allocation7], %s285
          %287 = dma.done %s283, 384
        $region40: #{tpu_custom_call.1} parent=35 // pred_fallthru
          _
      $region36: #{tpu_custom_call.1} parent=5 // pred_fallthru
        _
    $region6: #{tpu_custom_call.1} parent=1 // loop_footer
      %s22 = sadd.s32 1, %s18
    $region7: #{tpu_custom_call.1} parent=1 // loop_footer_branch
      %17 = sbr.rel target = $region3
    $region8: #{tpu_custom_call.1} parent=1 // loop_exit
      _
    %288 = vsyncpa [#allocation5], 1
    %s289 = scalar_lea.sflag [#allocation5], 1
    %290 = vsyncpa %s289, 1
    %291 = vsyncpa [#allocation6], 1
    %s292 = scalar_lea.sflag [#allocation6], 1
    %293 = vsyncpa %s292, 1

</llo_original>
